<compile_context>
chip_gen: v7x
topology: tpu7x:2x2x1
jax: 0.10.0
libtpu: 0.0.40
codegen_flags: <defaults>
</compile_context>

<pallas_src>
import jax
import jax.numpy as jnp
from jax.experimental import pallas as pl
from jax.experimental.pallas import tpu as pltpu


def _round_up(x, m):
    return (x + m - 1) // m * m


# --------------------------------------------------------------------------- kernel
def _patch_merging_kernel(x_ref, w_ref, b_ref, o_ref):
    # x_ref: (tm, K)   fused tap rows, layout (dy, dx, c) per row      (compute dtype)
    # w_ref: (K, tn)   reduction weights with BN scale folded          (compute dtype)
    # b_ref: (1, tn)   folded BN bias                                  (f32)
    # o_ref: (tm, tn)  lane-dense output tile (tn is a multiple of 128)
    acc = jnp.dot(x_ref[...], w_ref[...], preferred_element_type=jnp.float32)
    o_ref[...] = (acc + b_ref[...]).astype(o_ref.dtype)


# ------------------------------------------------------------------- tiling helpers
def _vmem_budget_bytes():
    """Generation-aware VMEM budget (tile picking) and scoped limit (Mosaic)."""
    cap = None
    try:
        info = pltpu.get_tpu_info()
        cap = getattr(info, "vmem_capacity_bytes", None)
    except Exception:
        cap = None
    if not cap:
        cap = 64 * 1024 * 1024          # conservative fallback (v7x per-TC VMEM)
    cap = int(cap)
    budget = int(cap * 0.70)            # working-set target for tile picking
    limit = int(cap * 0.82)             # scoped VMEM limit handed to the compiler
    return budget, limit


def _pick_tiles(m, k, cp, *, in_itemsize, out_itemsize, budget_bytes, tm_max,
                min_m_blocks=1):
    """Pick (tm, tn): lane-dense output tile + largest row tile fitting VMEM."""
    # --- output-channel tile: bound the (double-buffered) resident weight slab so
    # it never crowds out the row tile (important on v7x / large stages). ---
    q = cp // 128
    nj = 1
    tn = cp
    while tn > 128 and 2 * (k * tn * in_itemsize + tn * 4) > budget_bytes // 4:
        nj += 1
        tn = pl.cdiv(q, nj) * 128

    # --- row tile: largest multiple of 8 (<= tm_max) whose double-buffered
    # working set fits the budget; at least `min_m_blocks` grid steps along M. ---
    fixed = 2 * (k * tn * in_itemsize + tn * 4)          # weights + bias buffers
    def usage(tm_):
        return (fixed
                + 2 * tm_ * k * in_itemsize              # input rows, 2 buffers
                + 2 * tm_ * tn * out_itemsize)           # output tile, 2 buffers

    tm = min(tm_max, _round_up(m, 8))
    if min_m_blocks > 1:
        tm = min(tm, max(8, _round_up(pl.cdiv(m, min_m_blocks), 8)))
    while tm > 8 and usage(tm) > budget_bytes:
        tm = max(8, _round_up(tm // 2, 8))
    return tm, tn


# ------------------------------------------------------------------------- wrapper
def patch_merging_forward(x, conv_w, bn_gamma, bn_beta, bn_mean, bn_var, *,
                          stride=2, eps=1e-5, compute_dtype=jnp.bfloat16,
                          out_dtype=None, input_format="NCHW",
                          channels_last_output=False, tm_max=4096):
    """PatchMerging forward.

    x:       (N, C, H, W) if input_format == "NCHW", else (N, H, W, C).
    conv_w:  (2C, C, 2, 2) in PyTorch OIHW layout.
    Returns NCHW (PyTorch parity) unless channels_last_output=True (NHWC).
    """
    assert input_format in ("NCHW", "NHWC")
    Cout, Cin, kh, kw = conv_w.shape
    assert kh == stride and kw == stride == 2, "PatchMerging uses a 2x2 / stride-2 conv"

    if input_format == "NCHW":
        N, C, H, W = x.shape
    else:
        N, H, W, C = x.shape
    assert C == Cin and H % 2 == 0 and W % 2 == 0
    Ho, Wo = H // 2, W // 2
    M = N * Ho * Wo                 # number of output spatial positions
    K = 4 * C                       # fused contraction length: (dy, dx, c)
    Cp = _round_up(Cout, 128)       # lane-dense output width (do NOT pad further)

    out_dtype = jnp.dtype(compute_dtype) if out_dtype is None else jnp.dtype(out_dtype)
    in_itemsize = jnp.dtype(compute_dtype).itemsize

    # ---- fused tap matrix (M, 4C): one transpose pass over x (fused by XLA with
    # the cast).  For NHWC input it is a free contiguous reshape + minor permute. ----
    if input_format == "NCHW":
        x6 = x.reshape(N, C, Ho, 2, Wo, 2)                  # (N, C, ho, dy, wo, dx)
        x6 = jnp.transpose(x6, (0, 2, 4, 3, 5, 1))          # (N, ho, wo, dy, dx, C)
    else:
        x6 = x.reshape(N, Ho, 2, Wo, 2, C)                  # (N, ho, dy, wo, dx, C)
        x6 = jnp.transpose(x6, (0, 1, 3, 2, 4, 5))          # (N, ho, wo, dy, dx, C)
    taps = x6.reshape(M, K).astype(compute_dtype)

    # ---- conv weight OIHW -> (dy, dx, c, Cout) -> (4C, Cout); fold BN scale; pad. ----
    scale = (bn_gamma / jnp.sqrt(bn_var + eps)).astype(jnp.float32)
    bias = (bn_beta - bn_mean * scale).astype(jnp.float32)
    w = jnp.transpose(conv_w, (2, 3, 1, 0)).reshape(K, Cout).astype(jnp.float32)
    w = w * scale[None, :]
    w = jnp.pad(w, ((0, 0), (0, Cp - Cout))).astype(compute_dtype)
    b = jnp.pad(bias, (0, Cp - Cout)).reshape(1, Cp)

    budget_bytes, vmem_limit = _vmem_budget_bytes()
    tm, tn = _pick_tiles(M, K, Cp,
                         in_itemsize=in_itemsize,
                         out_itemsize=out_dtype.itemsize,
                         budget_bytes=budget_bytes,
                         tm_max=tm_max,
                         # >=2 row blocks so both v7x TensorCores get work
                         # (negligible overhead on single-TC v5e/v6e).
                         min_m_blocks=2 if M >= 16 else 1)
    grid = (pl.cdiv(M, tm), pl.cdiv(Cp, tn))

    out = pl.pallas_call(
        _patch_merging_kernel,
        out_shape=jax.ShapeDtypeStruct((M, Cp), out_dtype),
        grid_spec=pltpu.PrefetchScalarGridSpec(
            num_scalar_prefetch=0,
            grid=grid,
            in_specs=[
                pl.BlockSpec((tm, K), lambda i, j: (i, 0)),   # tap rows
                pl.BlockSpec((K, tn), lambda i, j: (0, j)),   # folded weights
                pl.BlockSpec((1, tn), lambda i, j: (0, j)),   # folded bias
            ],
            out_specs=pl.BlockSpec((tm, tn), lambda i, j: (i, j)),
        ),
        compiler_params=pltpu.CompilerParams(
            dimension_semantics=("parallel", "parallel"),
            vmem_limit_bytes=vmem_limit,
        ),
    )(taps, w, b)

    out = out[:, :Cout].reshape(N, Ho, Wo, Cout)
    if channels_last_output:
        return out                                 # NHWC, skips one HBM round trip
    return jnp.transpose(out, (0, 3, 1, 2))        # NCHW to match the PyTorch module


# ----------------------------------------------------------------------- reference
def _reference(x_nchw, conv_w, bn_gamma, bn_beta, bn_mean, bn_var, *, stride=2, eps=1e-5):
    y = jax.lax.conv_general_dilated(
        x_nchw, conv_w, window_strides=(stride, stride), padding="VALID",
        dimension_numbers=("NCHW", "OIHW", "NCHW"))
    scale = bn_gamma / jnp.sqrt(bn_var + eps)
    bias = bn_beta - bn_mean * scale
    return y * scale[None, :, None, None] + bias[None, :, None, None]


if __name__ == "__main__":
    key = jax.random.PRNGKey(0)
    N, dim, H, W = 2, 4, 16, 16
    patch_size2 = patch_stride2 = 2
    out_dim = 2 * dim

    k1, k2 = jax.random.split(key)
    x = jax.random.normal(k1, (N, dim, H, W), dtype=jnp.float32)
    conv_w = jax.random.normal(
        k2, (out_dim, dim, patch_size2, patch_size2), dtype=jnp.float32) * 0.1

    # deterministic synthetic BatchNorm2d(2*dim) parameters (inference mode)
    bn_gamma = jnp.linspace(0.5, 1.5, out_dim, dtype=jnp.float32)
    bn_beta = jnp.linspace(-0.2, 0.2, out_dim, dtype=jnp.float32)
    bn_mean = jnp.linspace(-0.1, 0.1, out_dim, dtype=jnp.float32)
    bn_var = jnp.linspace(0.9, 1.1, out_dim, dtype=jnp.float32)

    y_ref = _reference(x, conv_w, bn_gamma, bn_beta, bn_mean, bn_var,
                       stride=patch_stride2)

    # f32 path: exact check of the tap fusion / weight layout / BN fold plumbing.
    y_f32 = jax.block_until_ready(
        patch_merging_forward(x, conv_w, bn_gamma, bn_beta, bn_mean, bn_var,
                              stride=patch_stride2, compute_dtype=jnp.float32))
    assert y_f32.shape == (N, out_dim, H // 2, W // 2)
    assert jnp.allclose(y_f32, y_ref, atol=1e-5, rtol=1e-5)

    # bf16 fast path (default: bf16 inputs, weights AND output; f32 accumulation).
    y_bf16 = jax.block_until_ready(
        patch_merging_forward(x, conv_w, bn_gamma, bn_beta, bn_mean, bn_var,
                              stride=patch_stride2))
    assert y_bf16.shape == (N, out_dim, H // 2, W // 2)
    assert jnp.allclose(y_bf16.astype(jnp.float32), y_ref, atol=5e-2, rtol=5e-2)

    # channels-last pipeline path: NHWC in / NHWC out, no layout glue transposes.
    x_nhwc = jnp.transpose(x, (0, 2, 3, 1))
    y_nhwc = jax.block_until_ready(
        patch_merging_forward(x_nhwc, conv_w, bn_gamma, bn_beta, bn_mean, bn_var,
                              stride=patch_stride2, input_format="NHWC",
                              channels_last_output=True))
    assert y_nhwc.shape == (N, H // 2, W // 2, out_dim)
    assert jnp.allclose(y_nhwc.astype(jnp.float32),
                        jnp.transpose(y_ref, (0, 2, 3, 1)), atol=5e-2, rtol=5e-2)

    print("KERNEL_OK")
</pallas_src>

<mosaic_0001>
module attributes {stable_mosaic.version = 11 : i64} {
  func.func @_patch_merging_kernel(%arg0: i32, %arg1: i32, %arg2: memref<64x16xf32, #tpu.memory_space<vmem>>, %arg3: memref<16x128xf32, #tpu.memory_space<vmem>>, %arg4: memref<1x128xf32, #tpu.memory_space<vmem>>, %arg5: memref<64x128xf32, #tpu.memory_space<vmem>>) attributes {dimension_semantics = [#tpu.dimension_semantics<parallel>, #tpu.dimension_semantics<parallel>], iteration_bounds = array<i64: 2, 1>, scalar_prefetch = 0 : i64, scratch_operands = 0 : i64, tpu.core_type = #tpu.core_type<tc>, window_params = [{transform_indices = @transform_0, window_bounds = array<i64: 64, 16>}, {transform_indices = @transform_1, window_bounds = array<i64: 16, 128>}, {transform_indices = @transform_2, window_bounds = array<i64: 1, 128>}, {transform_indices = @transform_3, window_bounds = array<i64: 64, 128>}]} {
    %c0 = arith.constant 0 : index
    %c0_0 = arith.constant 0 : index
    %0 = vector.load %arg2[%c0, %c0_0] : memref<64x16xf32, #tpu.memory_space<vmem>>, vector<64x16xf32>
    %c0_1 = arith.constant 0 : index
    %c0_2 = arith.constant 0 : index
    %1 = vector.load %arg3[%c0_1, %c0_2] : memref<16x128xf32, #tpu.memory_space<vmem>>, vector<16x128xf32>
    %cst = arith.constant dense<0.000000e+00> : vector<64x128xf32>
    %2 = tpu.matmul %0, %1, %cst {dimension_numbers = #tpu.dot_dimension_numbers<[1], [0], [0], [1], [0, 0, 1, 1], [], []>} : vector<64x16xf32>, vector<16x128xf32>, vector<64x128xf32> -> vector<64x128xf32>
    %c0_3 = arith.constant 0 : index
    %c0_4 = arith.constant 0 : index
    %3 = vector.load %arg4[%c0_3, %c0_4] : memref<1x128xf32, #tpu.memory_space<vmem>>, vector<1x128xf32>
    %4 = vector.broadcast %3 : vector<1x128xf32> to vector<64x128xf32>
    %5 = arith.addf %2, %4 : vector<64x128xf32>
    %c0_5 = arith.constant 0 : index
    %c0_6 = arith.constant 0 : index
    %6 = vector.load %arg5[%c0_5, %c0_6] : memref<64x128xf32, #tpu.memory_space<vmem>>, vector<64x128xf32>
    tpu.vector_store %arg5[%c0_5, %c0_6], %5 {strides = array<i32>} : memref<64x128xf32, #tpu.memory_space<vmem>>, vector<64x128xf32>,
    return
  }
  func.func @transform_0(%arg0: i32, %arg1: i32) -> (i32, i32) {
    %c0_i32 = arith.constant 0 : i32
    %c0_i32_0 = arith.constant 0 : i32
    return %arg0, %c0_i32 : i32, i32
  }
  func.func @transform_1(%arg0: i32, %arg1: i32) -> (i32, i32) {
    %c0_i32 = arith.constant 0 : i32
    %c0_i32_0 = arith.constant 0 : i32
    return %c0_i32, %arg1 : i32, i32
  }
  func.func @transform_2(%arg0: i32, %arg1: i32) -> (i32, i32) {
    %c0_i32 = arith.constant 0 : i32
    %c0_i32_0 = arith.constant 0 : i32
    return %c0_i32, %arg1 : i32, i32
  }
  func.func @transform_3(%arg0: i32, %arg1: i32) -> (i32, i32) {
    %c0_i32 = arith.constant 0 : i32
    return %arg0, %arg1 : i32, i32
  }
}

</mosaic_0001>

<llo_original>
// kernel: tpu_custom_call.1
$region0: #{tpu_custom_call.1}
  #allocation0 [shape = 'u32[]', space=smem, size = 0x4, offset = 0x4, fixed_abs, tag = 'smem constant byte address 0x4 - core index']
  #allocation1 [shape = 'u32[144,128]{1,0:T(1,128)}', space=vmem, size = 0x12000, scoped, tag = 'internal scratch']
  %s0 = inlined_call_operand.vmem [shape: f32[128,16], index: 0, kind: input, shape index: {}]
  %s1 = inlined_call_operand.vmem [shape: f32[16,128], index: 1, kind: input, shape index: {}]
  %s2 = inlined_call_operand.vmem [shape: f32[1,128], index: 2, kind: input, shape index: {}]
  %s3 = inlined_call_operand.hbm [shape: f32[128,128], index: 3, kind: output, shape index: {}]
  %s4 = sld [smem:[#allocation0]]
  $region45: #{tpu_custom_call.1} parent=0
    _
  %s6 = ssub.s32 1, %s4
  %s7 = scalar_select 0, %s6, %s4
  $region1: #{tpu_custom_call.1} parent=0
    #allocation2 [shape = 'u8[65536]{0}', space=vmem, size = 0x10000, scoped, tag = 'output window, operand 0']
    #allocation3 [shape = 's32[2]{0}', space=sflag, size = 0x8, scoped, tag = 'scoped memory for tpu_custom_call.1']
    %8 = vsyncpa [#allocation3], 0
    %s9 = scalar_lea.sflag [#allocation3], 1
    %10 = vsyncpa %s9, 0
    loop: start=0, step=1, limit=4
    $region2: #{tpu_custom_call.1} parent=1 // loop_pre_header
      _
    $region3: #{tpu_custom_call.1} parent=1 // loop_header
      %s12 = sphi 0, %s16
      %p13 = scmp.ge.s32.totalorder %s12, 4
      %s19 = sphi 0, %s31
      %s20 = sphi 0, %s27
      %s21 = sphi 0, %s19
      %s22 = sphi 0, %s20
      %s23 = sphi 0, %s21
      %s24 = sphi 0, %s22
      %s34 = sphi 0, %s36
      %s37 = sphi 0, %s34
      %s38 = sphi 0, %s37
      %s54 = sphi 0, %s38
      %s60 = sphi 0, %s62
      %s63 = sphi 0, %s60
      %s64 = sphi 0, %s63
      %s80 = sphi 0, %s64
      %s86 = sphi 0, %s88
      %s89 = sphi 0, %s86
      %s90 = sphi 0, %s89
      %s106 = sphi 0, %s90
      %s114 = sphi 0, %s116
      %s117 = sphi 0, %s114
      %s118 = sphi 0, %s117
      %s134 = sphi 0, %s118
    $region4: #{tpu_custom_call.1} parent=1 // loop_header_branch
      %15 = sbr.rel (%p13) target = $region8
    $region5: #{tpu_custom_call.1} parent=1 // loop_body
      %s17 = ssub.s32 %s12, 1
      %s18 = ssub.s32 %s12, 2
      %s25 = sadd.s32 1, %s20
      %p26 = scmp.ge.s32.totalorder %s25, 1
      %s27 = scalar_select %p26, 0, %s25
      %s28 = sadd.s32 1, %s19
      %s29 = scalar_select %p26, %s28, %s19
      %p30 = scmp.ge.s32.totalorder %s29, 2
      %s31 = scalar_select %p30, 0, %s29
      %s32 = ssub.s32 %s19, %s31
      %p33 = scmp.eq.s32.totalorder %s32, 0
      %s35 = sadd.s32 %s34, 1
      %s36 = scalar_select %p33, %s34, %s35
      %p39 = pneg %p33
      %p40 = scmp.eq.s32.totalorder %s12, 1
      %p41 = por %p39, %p40
      %p42 = scmp.ne.s32.totalorder %s34, %s37
      %p43 = scmp.eq.s32.totalorder %s12, 0
      %p44 = por %p42, %p43
      %p45 = scmp.ne.s32.totalorder %s34, %s37
      %p46 = scmp.eq.s32.totalorder %s17, 1
      %p47 = por %p45, %p46
      %p48 = scmp.ne.s32.totalorder %s37, %s38
      %p49 = scmp.eq.s32.totalorder %s17, 0
      %p50 = por %p48, %p49
      %p51 = scmp.ne.s32.totalorder %s37, %s38
      %p52 = scmp.eq.s32.totalorder %s18, 1
      %p53 = por %p51, %p52
      %p55 = scmp.ne.s32.totalorder %s38, %s54
      %p56 = scmp.eq.s32.totalorder %s18, 0
      %p57 = por %p55, %p56
      %s58 = ssub.s32 %s20, %s27
      %p59 = scmp.eq.s32.totalorder %s58, 0
      %s61 = sadd.s32 %s60, 1
      %s62 = scalar_select %p59, %s60, %s61
      %p65 = pneg %p59
      %p66 = scmp.eq.s32.totalorder %s12, 1
      %p67 = por %p65, %p66
      %p68 = scmp.ne.s32.totalorder %s60, %s63
      %p69 = scmp.eq.s32.totalorder %s12, 0
      %p70 = por %p68, %p69
      %p71 = scmp.ne.s32.totalorder %s60, %s63
      %p72 = scmp.eq.s32.totalorder %s17, 1
      %p73 = por %p71, %p72
      %p74 = scmp.ne.s32.totalorder %s63, %s64
      %p75 = scmp.eq.s32.totalorder %s17, 0
      %p76 = por %p74, %p75
      %p77 = scmp.ne.s32.totalorder %s63, %s64
      %p78 = scmp.eq.s32.totalorder %s18, 1
      %p79 = por %p77, %p78
      %p81 = scmp.ne.s32.totalorder %s64, %s80
      %p82 = scmp.eq.s32.totalorder %s18, 0
      %p83 = por %p81, %p82
      %s84 = ssub.s32 %s20, %s27
      %p85 = scmp.eq.s32.totalorder %s84, 0
      %s87 = sadd.s32 %s86, 1
      %s88 = scalar_select %p85, %s86, %s87
      %p91 = pneg %p85
      %p92 = scmp.eq.s32.totalorder %s12, 1
      %p93 = por %p91, %p92
      %p94 = scmp.ne.s32.totalorder %s86, %s89
      %p95 = scmp.eq.s32.totalorder %s12, 0
      %p96 = por %p94, %p95
      %p97 = scmp.ne.s32.totalorder %s86, %s89
      %p98 = scmp.eq.s32.totalorder %s17, 1
      %p99 = por %p97, %p98
      %p100 = scmp.ne.s32.totalorder %s89, %s90
      %p101 = scmp.eq.s32.totalorder %s17, 0
      %p102 = por %p100, %p101
      %p103 = scmp.ne.s32.totalorder %s89, %s90
      %p104 = scmp.eq.s32.totalorder %s18, 1
      %p105 = por %p103, %p104
      %p107 = scmp.ne.s32.totalorder %s90, %s106
      %p108 = scmp.eq.s32.totalorder %s18, 0
      %p109 = por %p107, %p108
      %s110 = ssub.s32 %s19, %s31
      %s111 = ssub.s32 %s20, %s27
      %s112 = sor.u32 %s110, %s111
      %p113 = scmp.eq.s32.totalorder %s112, 0
      %s115 = sadd.s32 %s114, 1
      %s116 = scalar_select %p113, %s114, %s115
      %p119 = pneg %p113
      %p120 = scmp.eq.s32.totalorder %s12, 1
      %p121 = por %p119, %p120
      %p122 = scmp.ne.s32.totalorder %s114, %s117
      %p123 = scmp.eq.s32.totalorder %s12, 0
      %p124 = por %p122, %p123
      %p125 = scmp.ne.s32.totalorder %s114, %s117
      %p126 = scmp.eq.s32.totalorder %s17, 1
      %p127 = por %p125, %p126
      %p128 = scmp.ne.s32.totalorder %s117, %s118
      %p129 = scmp.eq.s32.totalorder %s17, 0
      %p130 = por %p128, %p129
      %p131 = scmp.ne.s32.totalorder %s117, %s118
      %p132 = scmp.eq.s32.totalorder %s18, 1
      %p133 = por %p131, %p132
      %p135 = scmp.ne.s32.totalorder %s118, %s134
      %p136 = scmp.eq.s32.totalorder %s18, 0
      %p137 = por %p135, %p136
      %p138 = scmp.le.s32.totalorder 1, %s12
      %p139 = scmp.lt.s32.totalorder %s12, 3
      %p140 = pnand %p138, %p139
      %p141 = pneg %p140
      // Predicated region
      $region9: #{tpu_custom_call.1} parent=5 // pred_check
        _
      $region10: #{tpu_custom_call.1} parent=5 // pred_check_branch
        %143 = sbr.rel (%p140) target = $region12
      $region11: #{tpu_custom_call.1} parent=5 // pred_region
        %s144 = ssub.s32 %s12, 1
        // Predicated region
        $region13: #{tpu_custom_call.1} parent=11 // pred_check
          %p145 = pneg %p76
        $region14: #{tpu_custom_call.1} parent=11 // pred_check_branch
          %147 = sbr.rel (%p145) target = $region16
        $region15: #{tpu_custom_call.1} parent=11 // pred_region
          %p148 = scmp.lt.s32.totalorder %s22, 0
          %s149 = scalar_select %p148, %s22, 0
          %s150 = smul.addr %s149, 8
          %s151 = scalar_lea.vmem %s1, %s150
        $region16: #{tpu_custom_call.1} parent=11 // pred_fallthru
          _
        // Predicated region
        $region17: #{tpu_custom_call.1} parent=11 // pred_check
          %p152 = pneg %p102
        $region18: #{tpu_custom_call.1} parent=11 // pred_check_branch
          %154 = sbr.rel (%p152) target = $region20
        $region19: #{tpu_custom_call.1} parent=11 // pred_region
          %p155 = scmp.lt.s32.totalorder %s22, 0
          %s156 = scalar_select %p155, %s22, 0
          %s157 = scalar_lea.vmem %s2, %s156
        $region20: #{tpu_custom_call.1} parent=11 // pred_fallthru
          _
      $region12: #{tpu_custom_call.1} parent=5 // pred_fallthru
        _
      %p158 = scmp.lt.s32.totalorder %s12, 2
      // Predicated region
      $region21: #{tpu_custom_call.1} parent=5 // pred_check
        %p159 = pneg %p158
      $region22: #{tpu_custom_call.1} parent=5 // pred_check_branch
        %161 = sbr.rel (%p159) target = $region24
      $region23: #{tpu_custom_call.1} parent=5 // pred_region
        // Predicated region
        $region25: #{tpu_custom_call.1} parent=23 // pred_check
          %p162 = pneg %p44
        $region26: #{tpu_custom_call.1} parent=23 // pred_check_branch
          %164 = sbr.rel (%p162) target = $region28
        $region27: #{tpu_custom_call.1} parent=23 // pred_region
          %s165 = smul.u32 8, %s19
          %p166 = scmp.lt.s32.totalorder %s165, 15
          %s167 = scalar_select %p166, %s165, 15
          %s168 = smul.addr %s167, 8
          %s169 = scalar_lea.vmem %s0, %s168
          %s170 = smul.u32 8, %s19
        $region28: #{tpu_custom_call.1} parent=23 // pred_fallthru
          _
      $region24: #{tpu_custom_call.1} parent=5 // pred_fallthru
        _
      %p171 = scmp.le.s32.totalorder 1, %s12
      %p172 = scmp.lt.s32.totalorder %s12, 3
      %p173 = pnand %p171, %p172
      %p174 = pneg %p173
      // Predicated region
      $region29: #{tpu_custom_call.1} parent=5 // pred_check
        _
      $region30: #{tpu_custom_call.1} parent=5 // pred_check_branch
        %176 = sbr.rel (%p173) target = $region32
      $region31: #{tpu_custom_call.1} parent=5 // pred_region
        %s177 = ssub.s32 %s12, 1
        %s178 = smul.u32 8, %s21
        %p179 = scmp.lt.s32.totalorder %s178, 15
        %s180 = scalar_select %p179, %s178, 15
        %s181 = smul.addr %s180, 8
        %s182 = scalar_lea.vmem %s0, %s181
        %p183 = pneg %p50
        %p184 = pneg %p47
        %p185 = scmp.lt.s32.totalorder %s22, 0
        %s186 = scalar_select %p185, %s22, 0
        %s187 = smul.addr %s186, 8
        %s188 = scalar_lea.vmem %s1, %s187
        %p189 = pneg %p76
        %p190 = pneg %p73
        %p191 = scmp.lt.s32.totalorder %s22, 0
        %s192 = scalar_select %p191, %s22, 0
        %s193 = scalar_lea.vmem %s2, %s192
        %p194 = pneg %p102
        %p195 = pneg %p99
        %p196 = pneg %p130
        %p197 = pneg %p127
        %s198 = sand.u32 %s117, 1
        %s199 = scalar_lea.sflag [#allocation3], %s198
        %s200 = sand.u32 %s117, 1
        %s201 = smul.addr %s200, 64
        %s202 = scalar_lea.vmem [#allocation2], %s201
        %s203 = smul.u32 8, %s21
        %p204 = scmp.lt.s32.totalorder %s203, 15
        %s205 = scalar_select %p204, %s203, 15
        %s206 = smul.addr %s205, 8
        %s207 = scalar_lea.vmem %s0, %s206
        %s208 = smul.u32 8, %s21
        %p209 = scmp.lt.s32.totalorder %s22, 0
        %s210 = scalar_select %p209, %s22, 0
        %s211 = smul.addr %s210, 8
        %s212 = scalar_lea.vmem %s1, %s211
        %p213 = scmp.lt.s32.totalorder %s22, 0
        %s214 = scalar_select %p213, %s22, 0
        %s215 = scalar_lea.vmem %s2, %s214
        %s216 = smul.u32 8, %s21
        %v217 = vld [vmem:[%s207] sm:$0xff]
        %v218 = vld [vmem:[%s207 + $0x8] sm:$0xff]
        %v219 = vld [vmem:[%s207 + $0x10] sm:$0xff]
        %v220 = vld [vmem:[%s207 + $0x18] sm:$0xff]
        %v221 = vld [vmem:[%s207 + $0x20] sm:$0xff]
        %v222 = vld [vmem:[%s207 + $0x28] sm:$0xff]
        %v223 = vld [vmem:[%s207 + $0x30] sm:$0xff]
        %v224 = vld [vmem:[%s207 + $0x38] sm:$0xff]
        %v225 = vld [vmem:[%s212] sm:$0xff]
        %v226 = vld [vmem:[%s212 + $0x8] sm:$0xff]
        %v227 = vld [vmem:[%s215] sm:$0x1]
        %v229 = vlaneseq
        %v230 = vshrl.u32 %v229, 7
        %v231 = vsub.s32 0, %v230
        %v232 = vrot.slane %v227, %v231
        %vm234 = vcmask 130048
        %v236 = vsel %vm234, %v217, 0
        %v239 = vsel %vm234, %v218, 0
        %v242 = vsel %vm234, %v219, 0
        %v245 = vsel %vm234, %v220, 0
        %v248 = vsel %vm234, %v221, 0
        %v251 = vsel %vm234, %v222, 0
        %v254 = vsel %vm234, %v223, 0
        %v257 = vsel %vm234, %v224, 0
        %259 = vmatprep.subr.mxu0 0.0
        %260 = vmatpush1.msra.mxu0 %v225
        %261 = vmatprep.subr.mxu0 0.0
        %262 = vmatpush1.msra.mxu0 %v226
        %263 = vmatprep.subr.mxu0 0.0
        %264 = vmatpush1.msra.mxu0 0.0
        %265 = vmatprep.subr.mxu0 0.0
        %266 = vmatpush1.msra.mxu0 0.0
        %267 = vmatprep.subr.mxu0 0.0
        %268 = vmatpush1.msra.mxu0 0.0
        %269 = vmatprep.subr.mxu0 0.0
        %270 = vmatpush1.msra.mxu0 0.0
        %271 = vmatprep.subr.mxu0 0.0
        %272 = vmatpush1.msra.mxu0 0.0
        %273 = vmatprep.subr.mxu0 0.0
        %274 = vmatpush1.msra.mxu0 0.0
        %275 = vmatprep.subr.mxu0 0.0
        %276 = vmatpush1.msra.mxu0 0.0
        %277 = vmatprep.subr.mxu0 0.0
        %278 = vmatpush1.msra.mxu0 0.0
        %279 = vmatprep.subr.mxu0 0.0
        %280 = vmatpush1.msra.mxu0 0.0
        %281 = vmatprep.subr.mxu0 0.0
        %282 = vmatpush1.msra.mxu0 0.0
        %283 = vmatprep.subr.mxu0 0.0
        %284 = vmatpush1.msra.mxu0 0.0
        %285 = vmatprep.subr.mxu0 0.0
        %286 = vmatpush1.msra.mxu0 0.0
        %287 = vmatprep.subr.mxu0 0.0
        %288 = vmatpush1.msra.mxu0 0.0
        %289 = vmatprep.subr.mxu0 0.0
        %290 = vmatpush1.msra.mxu0 0.0
        %291 = vmatprep.subr.mxu0 0.0
        %292 = vmatpush1.msra.mxu0 0.0
        %293 = vmatprep.subr.mxu0 0.0
        %294 = vmatpush1.msra.mxu0 0.0
        %295 = vmatprep.subr.mxu0 0.0
        %296 = vmatpush1.msra.mxu0 0.0
        %297 = vmatprep.subr.mxu0 0.0
        %298 = vmatpush1.msra.mxu0 0.0
        %299 = vmatprep.subr.mxu0 0.0
        %300 = vmatpush1.msra.mxu0 0.0
        %301 = vmatprep.subr.mxu0 0.0
        %302 = vmatpush1.msra.mxu0 0.0
        %303 = vmatprep.subr.mxu0 0.0
        %304 = vmatpush1.msra.mxu0 0.0
        %305 = vmatprep.subr.mxu0 0.0
        %306 = vmatpush1.msra.mxu0 0.0
        %307 = vmatprep.subr.mxu0 0.0
        %308 = vmatpush1.msra.mxu0 0.0
        %309 = vmatprep.subr.mxu0 0.0
        %310 = vmatpush1.msra.mxu0 0.0
        %311 = vmatprep.subr.mxu0 0.0
        %312 = vmatpush1.msra.mxu0 0.0
        %313 = vmatprep.subr.mxu0 0.0
        %314 = vmatpush1.msra.mxu0 0.0
        %315 = vmatprep.subr.mxu0 0.0
        %316 = vmatpush1.msra.mxu0 0.0
        %317 = vmatprep.subr.mxu0 0.0
        %318 = vmatpush1.msra.mxu0 0.0
        %319 = vmatprep.subr.mxu0 0.0
        %320 = vmatpush1.msra.mxu0 0.0
        %321 = vmatprep.subr.mxu0 0.0
        %322 = vmatpush1.msra.mxu0 0.0
        %323 = vmatprep.mubr.f32.mxu0 0.0
        %324 = vmatmul.mubr.f32.gmra.mrb[0].mxu0 %v236
        %v325 = vpop.f32.mrb[0].mxu0
        %v326 = vadd.f32 %v232, %v325
        %v327 = vpop.f32.mrb[0].mxu0
        %328 = vmatprep.mubr.f32.mxu0 0.0
        %329 = vmatmul.mubr.f32.gmra.mrb[0].mxu0 %v239
        %v330 = vpop.f32.mrb[0].mxu0
        %v331 = vadd.f32 %v232, %v330
        %v332 = vpop.f32.mrb[0].mxu0
        %333 = vmatprep.mubr.f32.mxu0 0.0
        %334 = vmatmul.mubr.f32.gmra.mrb[0].mxu0 %v242
        %v335 = vpop.f32.mrb[0].mxu0
        %v336 = vadd.f32 %v232, %v335
        %v337 = vpop.f32.mrb[0].mxu0
        %338 = vmatprep.mubr.f32.mxu0 0.0
        %339 = vmatmul.mubr.f32.gmra.mrb[0].mxu0 %v245
        %v340 = vpop.f32.mrb[0].mxu0
        %v341 = vadd.f32 %v232, %v340
        %v342 = vpop.f32.mrb[0].mxu0
        %343 = vmatprep.mubr.f32.mxu0 0.0
        %344 = vmatmul.mubr.f32.gmra.mrb[0].mxu0 %v248
        %v345 = vpop.f32.mrb[0].mxu0
        %v346 = vadd.f32 %v232, %v345
        %v347 = vpop.f32.mrb[0].mxu0
        %348 = vmatprep.mubr.f32.mxu0 0.0
        %349 = vmatmul.mubr.f32.gmra.mrb[0].mxu0 %v251
        %v350 = vpop.f32.mrb[0].mxu0
        %v351 = vadd.f32 %v232, %v350
        %v352 = vpop.f32.mrb[0].mxu0
        %353 = vmatprep.mubr.f32.mxu0 0.0
        %354 = vmatmul.mubr.f32.gmra.mrb[0].mxu0 %v254
        %v355 = vpop.f32.mrb[0].mxu0
        %v356 = vadd.f32 %v232, %v355
        %v357 = vpop.f32.mrb[0].mxu0
        %358 = vmatprep.mubr.f32.mxu0 0.0
        %359 = vmatmul.mubr.f32.gmra.mrb[0].mxu0 %v257
        %v360 = vpop.f32.mrb[0].mxu0
        %v361 = vadd.f32 %v232, %v360
        %v362 = vpop.f32.mrb[0].mxu0
        %363 = vdwg.mxu0
        %364 = vst [vmem:[%s202] sm:$0xff] %v326
        %365 = vst [vmem:[%s202 + $0x8] sm:$0xff] %v331
        %366 = vst [vmem:[%s202 + $0x10] sm:$0xff] %v336
        %367 = vst [vmem:[%s202 + $0x18] sm:$0xff] %v341
        %368 = vst [vmem:[%s202 + $0x20] sm:$0xff] %v346
        %369 = vst [vmem:[%s202 + $0x28] sm:$0xff] %v351
        %370 = vst [vmem:[%s202 + $0x30] sm:$0xff] %v356
        %371 = vst [vmem:[%s202 + $0x38] sm:$0xff] %v361
        %s372 = sand.u32 %s117, 1
        %s373 = scalar_lea.sflag [#allocation3], %s372
        %s374 = sand.u32 %s117, 1
        %s375 = smul.addr %s374, 64
        %s376 = scalar_lea.vmem [#allocation2], %s375
        // Predicated region
        $region33: #{tpu_custom_call.1} parent=31 // pred_check
          %p377 = pneg %p127
        $region34: #{tpu_custom_call.1} parent=31 // pred_check_branch
          %379 = sbr.rel (%p377) target = $region36
        $region35: #{tpu_custom_call.1} parent=31 // pred_region
          %s380 = smul.u32 8, %s21
          %s382 = ssub.s32 1024, 1024
          %383 = vsyncadd %s373, %s382
          %s384 = sadd.s32 %s22, %s380
          %s385 = smul.addr %s384, 128
          %s386 = scalar_lea.hbm %s3, %s385
          %s387 = sshll.u32 %s376, 4
          %s388 = int_to_ptr.vmem [resolvable:$true] %s387
          %393 = dma.vmem_to_hbm [thread:$0]  %s388, 1024, %s386, %s373, 128, 128, 8
        $region36: #{tpu_custom_call.1} parent=31 // pred_fallthru
          _
      $region32: #{tpu_custom_call.1} parent=5 // pred_fallthru
        _
      %p394 = scmp.le.s32.totalorder 2, %s12
      // Predicated region
      $region37: #{tpu_custom_call.1} parent=5 // pred_check
        %p395 = pneg %p394
      $region38: #{tpu_custom_call.1} parent=5 // pred_check_branch
        %397 = sbr.rel (%p395) target = $region40
      $region39: #{tpu_custom_call.1} parent=5 // pred_region
        %s398 = ssub.s32 %s12, 2
        // Predicated region
        $region41: #{tpu_custom_call.1} parent=39 // pred_check
          %p399 = pneg %p133
        $region42: #{tpu_custom_call.1} parent=39 // pred_check_branch
          %401 = sbr.rel (%p399) target = $region44
        $region43: #{tpu_custom_call.1} parent=39 // pred_region
          %s402 = sand.u32 %s118, 1
          %s403 = scalar_lea.sflag [#allocation3], %s402
          %s404 = sand.u32 %s118, 1
          %s405 = smul.addr %s404, 64
          %s406 = scalar_lea.vmem [#allocation2], %s405
          %407 = dma.done %s403, 1024
        $region44: #{tpu_custom_call.1} parent=39 // pred_fallthru
          _
      $region40: #{tpu_custom_call.1} parent=5 // pred_fallthru
        _
    $region6: #{tpu_custom_call.1} parent=1 // loop_footer
      %s16 = sadd.s32 1, %s12
    $region7: #{tpu_custom_call.1} parent=1 // loop_footer_branch
      %11 = sbr.rel target = $region3
    $region8: #{tpu_custom_call.1} parent=1 // loop_exit
      _
    %408 = vsyncpa [#allocation3], 1
    %s409 = scalar_lea.sflag [#allocation3], 1
    %410 = vsyncpa %s409, 1

</llo_original>
